<compile_context>
chip_gen: v5e
topology: v5e:2x2
jax: 0.10.0
libtpu: 0.0.40
codegen_flags: <defaults>
</compile_context>

<pallas_src>
import functools

import jax
import jax.numpy as jnp
from jax.experimental import pallas as pl
from jax.experimental.pallas import tpu as pltpu


def _scoped_vmem_limit_bytes() -> int:
    """64 MiB scoped on 128-MiB-VMEM chips (v5e/v6e) so large batch tiles fit;
    32 MiB where physical VMEM is only 64 MiB (v7x).  Conservative fallback."""
    try:
        phys = pltpu.get_tpu_info().vmem_capacity_bytes
    except Exception:
        phys = 64 * 1024 * 1024
    return (64 if phys >= 128 * 1024 * 1024 else 32) * 1024 * 1024


# -----------------------------------------------------------------------------
# Fused 2-layer MLP encoder kernel:  relu(x @ W1 + b1) @ W2 + b2
# -----------------------------------------------------------------------------
def _mlp_kernel(x_ref, w1_ref, b1_ref, w2_ref, b2_ref, o_ref):
    # x_ref : [TB, D_in]            w1_ref: [D_in, D_h]  (bf16, resident)
    # b1_ref: [1, D_h]   (f32)      w2_ref: [D_h, D_out] (bf16, resident)
    # b2_ref: [1, D_out] (f32)      o_ref : [TB, D_out]
    # Matmuls run on the MXU in bf16 with f32 accumulation; bias/ReLU epilogue
    # stays in f32 on the VPU.  The x cast is a no-op when the caller already
    # feeds bf16; weights arrive pre-cast so no per-step conversion happens.
    x = x_ref[...].astype(jnp.bfloat16)
    h = jnp.dot(x, w1_ref[...], preferred_element_type=jnp.float32)
    h = jnp.maximum(h + b1_ref[...], 0.0)
    y = jnp.dot(h.astype(jnp.bfloat16), w2_ref[...],
                preferred_element_type=jnp.float32)
    # D_out=16 (<128) lowers to masked stores; output is ~1.5% of bytes so a
    # lane-dense packed output slab is not worth the plumbing here.
    o_ref[...] = (y + b2_ref[...]).astype(o_ref.dtype)


def mlp_forward(x2d, params, *, batch_tile: int = 2048, x_buffer_count=None):
    """Batch-tiled fused MLP forward.

    The batch axis is the (only) grid axis: x/out tiles are double-buffered by
    the Pallas pipeline (HBM DMA overlapped with MXU compute) while weights and
    biases use a constant index_map so they stay resident in VMEM for the whole
    grid.  With D_in=1024 -> 32 -> 16 the kernel is purely HBM-read-bound on x
    (~16 flop/byte), so perf comes from bytes and grid-step count: big batch
    tiles (2048 f32 rows = 2 x 8 MiB double buffer, well under the scoped VMEM
    limit on every generation), bf16 x when the producer supplies it, and at
    least 2 grid steps so v7x's two TensorCores both get work.
    """
    w1, b1, w2, b2 = params["w1"], params["b1"], params["w2"], params["b2"]
    B, D_in = x2d.shape
    D_h = w1.shape[1]
    D_out = w2.shape[1]

    # Pre-cast weights to bf16 ONCE here (tiny tensors) instead of per grid
    # step inside the body; biases stay f32 for the epilogue add.
    w1c = w1 if w1.dtype == jnp.bfloat16 else w1.astype(jnp.bfloat16)
    w2c = w2 if w2.dtype == jnp.bfloat16 else w2.astype(jnp.bfloat16)

    tb = min(B, batch_tile)
    if B > 8 and pl.cdiv(B, tb) < 2:
        # Single-step grid would leave one v7x TensorCore idle; split into >=2
        # batch tiles (multiple of 8 sublane rows).  No-op for tiny batches.
        tb = max(8, ((pl.cdiv(B, 2) + 7) // 8) * 8)
    grid = (pl.cdiv(B, tb),)

    # Pipeline-depth sweep knob on the single mem-bound input stream.
    x_spec_kwargs = {}
    if x_buffer_count is not None and x_buffer_count != 2:
        x_spec_kwargs["pipeline_mode"] = pl.Buffered(x_buffer_count)
    x_spec = pl.BlockSpec((tb, D_in), lambda i: (i, 0), **x_spec_kwargs)

    # Weights / biases: same block every grid step -> fetched once, resident.
    resident = lambda a: pl.BlockSpec(a.shape, lambda i: (0,) * a.ndim)

    itemsize = x2d.dtype.itemsize
    cost = pl.CostEstimate(
        flops=2 * B * D_in * D_h + 2 * B * D_h * D_out,
        transcendentals=0,
        bytes_accessed=(B * D_in * itemsize            # x read (dominant)
                        + w1c.size * 2 + w2c.size * 2  # bf16 weights
                        + b1.size * b1.dtype.itemsize + b2.size * b2.dtype.itemsize
                        + B * D_out * itemsize),       # output write
    )

    return pl.pallas_call(
        _mlp_kernel,
        out_shape=jax.ShapeDtypeStruct((B, D_out), x2d.dtype),
        grid=grid,
        in_specs=[
            x_spec,                                    # x: tiled over batch
            resident(w1c), resident(b1), resident(w2c), resident(b2),
        ],
        out_specs=pl.BlockSpec((tb, D_out), lambda i: (i, 0)),
        compiler_params=pltpu.CompilerParams(
            dimension_semantics=("parallel",),
            vmem_limit_bytes=_scoped_vmem_limit_bytes(),
        ),
        cost_estimate=cost,
    )(x2d, w1c, b1, w2c, b2)


# -----------------------------------------------------------------------------
# Momentum (EMA) update kernel:  k <- m*k + (1-m)*q   -- ALL params, one launch
# -----------------------------------------------------------------------------
def _ema_fused_kernel(m_ref, *refs, n):
    m = m_ref[0]                       # runtime momentum scalar from SMEM
    k_refs = refs[:n]
    q_refs = refs[n:2 * n]
    o_refs = refs[2 * n:]
    for k_ref, q_ref, o_ref in zip(k_refs, q_refs, o_refs):
        o_ref[...] = (k_ref[...] * m + q_ref[...] * (1.0 - m)).astype(o_ref.dtype)


def ema_update_all(params_k, params_q, momentum):
    """One pallas_call updating every momentum parameter (no grid: ~130 KiB
    total, pure launch-latency bound).  param_k inputs alias the outputs so the
    update is in place.  `momentum` is a traced runtime scalar (SMEM), so a
    BYOL/MoCo momentum schedule never triggers recompilation."""
    names = sorted(params_k.keys())
    ks = [params_k[nm] for nm in names]
    qs = [params_q[nm] for nm in names]
    n = len(names)

    m_arr = jnp.asarray(momentum, jnp.float32).reshape((1,))

    full = lambda a: pl.BlockSpec(a.shape, lambda: (0,) * a.ndim)
    smem_spec = pl.BlockSpec(memory_space=pltpu.MemorySpace.SMEM)

    # TODO(synk): if the parameter set grows to transformer scale, flatten all
    # params into one lane-dense concatenated 1D slab instead of 3n refs.
    outs = pl.pallas_call(
        functools.partial(_ema_fused_kernel, n=n),
        out_shape=tuple(jax.ShapeDtypeStruct(a.shape, a.dtype) for a in ks),
        in_specs=[smem_spec] + [full(a) for a in ks] + [full(a) for a in qs],
        out_specs=tuple(full(a) for a in ks),
        # momentum is input 0, so k_i is input i+1 -> alias to output i.
        input_output_aliases={i + 1: i for i in range(n)},
    )(m_arr, *ks, *qs)
    return dict(zip(names, outs))


# momentum is a traced argument -> new schedule values reuse the compilation.
_ema_update_jit = jax.jit(ema_update_all)


# -----------------------------------------------------------------------------
# MomentumEncoder wrapper (plain-Python glue around the Pallas kernels)
# -----------------------------------------------------------------------------
class MomentumEncoder:
    def __init__(self, encoder_params, momentum: float = 0.999):
        self.momentum = momentum
        self.encoder_params = encoder_params
        # deep copy of encoder params -> momentum encoder (frozen / no-grad)
        self.momentum_params = jax.tree_util.tree_map(jnp.copy, encoder_params)

    def update_momentum_encoder(self):
        self.momentum_params = _ema_update_jit(
            self.momentum_params, self.encoder_params, self.momentum)

    def __call__(self, x, use_momentum: bool = False):
        # x: NCHW [B, C, H, W]  -> flatten to [B, C*H*W]
        B = x.shape[0]
        x2d = x.reshape(B, -1)
        params = self.momentum_params if use_momentum else self.encoder_params
        return mlp_forward(x2d, params)


# -----------------------------------------------------------------------------
def _init_params(key, d_in, d_h, d_out, dtype=jnp.float32):
    k1, k2, k3, k4 = jax.random.split(key, 4)
    return {
        "w1": (jax.random.normal(k1, (d_in, d_h), dtype) * 0.02),
        "b1": (jax.random.normal(k2, (1, d_h), dtype) * 0.02),
        "w2": (jax.random.normal(k3, (d_h, d_out), dtype) * 0.02),
        "b2": (jax.random.normal(k4, (1, d_out), dtype) * 0.02),
    }


def _mlp_ref_f32(x2d, p):
    h = jnp.maximum(x2d.astype(jnp.float32) @ p["w1"] + p["b1"], 0.0)
    return h @ p["w2"] + p["b2"]


def _mlp_ref_bf16(x2d, p):
    # Matches the kernel's bf16-inputs / f32-accumulate matmul arithmetic.
    h = jnp.dot(x2d.astype(jnp.bfloat16), p["w1"].astype(jnp.bfloat16),
                preferred_element_type=jnp.float32)
    h = jnp.maximum(h + p["b1"], 0.0)
    y = jnp.dot(h.astype(jnp.bfloat16), p["w2"].astype(jnp.bfloat16),
                preferred_element_type=jnp.float32)
    return y + p["b2"]


if __name__ == "__main__":
    key = jax.random.PRNGKey(0)
    k_x, k_p = jax.random.split(key)

    B, C, H, W = 2, 4, 16, 16
    D_in, D_h, D_out = C * H * W, 32, 16

    x = jax.random.normal(k_x, (B, C, H, W), jnp.float32)
    enc_params = _init_params(k_p, D_in, D_h, D_out)

    model = MomentumEncoder(enc_params, momentum=0.999)

    # forward with online encoder
    y_online = model(x, use_momentum=False)
    # forward with momentum encoder (equivalent to torch.no_grad path)
    y_mom = model(x, use_momentum=True)
    # one EMA update of the momentum encoder, then another momentum forward
    model.update_momentum_encoder()
    y_mom2 = model(x, use_momentum=True)

    jax.block_until_ready((y_online, y_mom, y_mom2))

    # ---------------- correctness checks ----------------
    x2d = x.reshape(B, -1)

    # exact-arithmetic reference (bf16 MXU path, f32 accumulate)
    ref_bf16 = _mlp_ref_bf16(x2d, enc_params)
    assert jnp.allclose(y_online, ref_bf16, atol=1e-3, rtol=1e-3)
    assert jnp.allclose(y_mom, ref_bf16, atol=1e-3, rtol=1e-3)  # identical copy at init

    # semantics check vs full-f32 PyTorch-style reference (bf16 matmul tolerance)
    ref_f32 = _mlp_ref_f32(x2d, enc_params)
    assert jnp.allclose(y_online, ref_f32, atol=2e-2, rtol=2e-2)

    # bf16 x end-to-end path (the HBM-bytes lever): kernel accepts bf16 input.
    x_bf = x2d.astype(jnp.bfloat16)
    y_bf = mlp_forward(x_bf, enc_params)
    assert jnp.allclose(y_bf.astype(jnp.float32), _mlp_ref_bf16(x_bf, enc_params),
                        atol=2e-2, rtol=2e-2)

    # multi-tile batch path (>=2 grid steps, exercises megacore split + pipeline)
    B2 = 96
    xb = jax.random.normal(jax.random.PRNGKey(1), (B2, D_in), jnp.float32)
    yb = mlp_forward(xb, enc_params)
    assert yb.shape == (B2, D_out)
    assert jnp.allclose(yb, _mlp_ref_bf16(xb, enc_params), atol=1e-3, rtol=1e-3)

    # EMA check #1: identical k/q at init -> momentum params stay ~equal to q.
    m = model.momentum
    for nm in enc_params:
        ema_ref = enc_params[nm] * m + enc_params[nm] * (1.0 - m)
        assert jnp.allclose(model.momentum_params[nm], ema_ref, atol=1e-6, rtol=1e-6)
    assert jnp.allclose(y_mom2, _mlp_ref_bf16(x2d, model.momentum_params),
                        atol=1e-3, rtol=1e-3)

    # EMA check #2: DISTINCT k/q tensors and a different runtime momentum value
    # (no recompile — momentum is a traced SMEM scalar).
    k_before = {nm: jnp.array(v) for nm, v in model.momentum_params.items()}
    q_new = {}
    for i, nm in enumerate(sorted(enc_params)):
        q_new[nm] = enc_params[nm] + 0.1 * jax.random.normal(
            jax.random.fold_in(k_p, i), enc_params[nm].shape, enc_params[nm].dtype)
    model.encoder_params = q_new
    model.momentum = 0.9
    model.update_momentum_encoder()
    jax.block_until_ready(model.momentum_params)
    for nm in enc_params:
        ema_ref = k_before[nm] * 0.9 + q_new[nm] * 0.1
        assert jnp.allclose(model.momentum_params[nm], ema_ref, atol=1e-6, rtol=1e-6)

    print("KERNEL_OK")
</pallas_src>

<mosaic_0001>
module attributes {stable_mosaic.version = 11 : i64} {
  func.func @_mlp_kernel(%arg0: i32, %arg1: memref<2x1024xf32, #tpu.memory_space<vmem>>, %arg2: memref<1024x32xbf16, #tpu.memory_space<vmem>>, %arg3: memref<1x32xf32, #tpu.memory_space<vmem>>, %arg4: memref<32x16xbf16, #tpu.memory_space<vmem>>, %arg5: memref<1x16xf32, #tpu.memory_space<vmem>>, %arg6: memref<2x16xf32, #tpu.memory_space<vmem>>) attributes {dimension_semantics = [#tpu.dimension_semantics<parallel>], iteration_bounds = array<i64: 1>, scalar_prefetch = 0 : i64, scratch_operands = 0 : i64, tpu.core_type = #tpu.core_type<tc>, window_params = [{transform_indices = @transform_0, window_bounds = array<i64: 2, 1024>}, {pipeline_mode = #tpu.pipeline_mode<synchronous>, transform_indices = @transform_1, window_bounds = array<i64: 1024, 32>}, {pipeline_mode = #tpu.pipeline_mode<synchronous>, transform_indices = @transform_2, window_bounds = array<i64: 1, 32>}, {pipeline_mode = #tpu.pipeline_mode<synchronous>, transform_indices = @transform_3, window_bounds = array<i64: 32, 16>}, {pipeline_mode = #tpu.pipeline_mode<synchronous>, transform_indices = @transform_4, window_bounds = array<i64: 1, 16>}, {transform_indices = @transform_5, window_bounds = array<i64: 2, 16>}]} {
    %c0 = arith.constant 0 : index
    %c0_0 = arith.constant 0 : index
    %0 = vector.load %arg1[%c0, %c0_0] : memref<2x1024xf32, #tpu.memory_space<vmem>>, vector<2x1024xf32>
    %1 = arith.truncf %0 : vector<2x1024xf32> to vector<2x1024xbf16>
    %c0_1 = arith.constant 0 : index
    %c0_2 = arith.constant 0 : index
    %2 = vector.load %arg2[%c0_1, %c0_2] : memref<1024x32xbf16, #tpu.memory_space<vmem>>, vector<1024x32xbf16>
    %cst = arith.constant dense<0.000000e+00> : vector<2x32xf32>
    %3 = tpu.matmul %1, %2, %cst {dimension_numbers = #tpu.dot_dimension_numbers<[1], [0], [0], [1], [0, 0, 1, 1], [], []>} : vector<2x1024xbf16>, vector<1024x32xbf16>, vector<2x32xf32> -> vector<2x32xf32>
    %c0_3 = arith.constant 0 : index
    %c0_4 = arith.constant 0 : index
    %4 = vector.load %arg3[%c0_3, %c0_4] : memref<1x32xf32, #tpu.memory_space<vmem>>, vector<1x32xf32>
    %5 = vector.broadcast %4 : vector<1x32xf32> to vector<2x32xf32>
    %6 = arith.addf %3, %5 : vector<2x32xf32>
    %cst_5 = arith.constant 0.000000e+00 : f32
    %7 = vector.broadcast %cst_5 : f32 to vector<2x32xf32>
    %8 = arith.maximumf %6, %7 : vector<2x32xf32>
    %9 = arith.truncf %8 : vector<2x32xf32> to vector<2x32xbf16>
    %c0_6 = arith.constant 0 : index
    %c0_7 = arith.constant 0 : index
    %10 = vector.load %arg4[%c0_6, %c0_7] : memref<32x16xbf16, #tpu.memory_space<vmem>>, vector<32x16xbf16>
    %cst_8 = arith.constant dense<0.000000e+00> : vector<2x16xf32>
    %11 = tpu.matmul %9, %10, %cst_8 {dimension_numbers = #tpu.dot_dimension_numbers<[1], [0], [0], [1], [0, 0, 1, 1], [], []>} : vector<2x32xbf16>, vector<32x16xbf16>, vector<2x16xf32> -> vector<2x16xf32>
    %c0_9 = arith.constant 0 : index
    %c0_10 = arith.constant 0 : index
    %12 = vector.load %arg5[%c0_9, %c0_10] : memref<1x16xf32, #tpu.memory_space<vmem>>, vector<1x16xf32>
    %13 = vector.broadcast %12 : vector<1x16xf32> to vector<2x16xf32>
    %14 = arith.addf %11, %13 : vector<2x16xf32>
    %c0_11 = arith.constant 0 : index
    %c0_12 = arith.constant 0 : index
    %15 = vector.load %arg6[%c0_11, %c0_12] : memref<2x16xf32, #tpu.memory_space<vmem>>, vector<2x16xf32>
    tpu.vector_store %arg6[%c0_11, %c0_12], %14 {strides = array<i32>} : memref<2x16xf32, #tpu.memory_space<vmem>>, vector<2x16xf32>,
    return
  }
  func.func @transform_0(%arg0: i32) -> (i32, i32) {
    %c0_i32 = arith.constant 0 : i32
    %c0_i32_0 = arith.constant 0 : i32
    return %arg0, %c0_i32 : i32, i32
  }
  func.func @transform_1(%arg0: i32) -> (i32, i32) {
    %c0_i32 = arith.constant 0 : i32
    %c0_i32_0 = arith.constant 0 : i32
    %c0_i32_1 = arith.constant 0 : i32
    return %c0_i32, %c0_i32_0 : i32, i32
  }
  func.func @transform_2(%arg0: i32) -> (i32, i32) {
    %c0_i32 = arith.constant 0 : i32
    %c0_i32_0 = arith.constant 0 : i32
    %c0_i32_1 = arith.constant 0 : i32
    return %c0_i32, %c0_i32_0 : i32, i32
  }
  func.func @transform_3(%arg0: i32) -> (i32, i32) {
    %c0_i32 = arith.constant 0 : i32
    %c0_i32_0 = arith.constant 0 : i32
    %c0_i32_1 = arith.constant 0 : i32
    return %c0_i32, %c0_i32_0 : i32, i32
  }
  func.func @transform_4(%arg0: i32) -> (i32, i32) {
    %c0_i32 = arith.constant 0 : i32
    %c0_i32_0 = arith.constant 0 : i32
    %c0_i32_1 = arith.constant 0 : i32
    return %c0_i32, %c0_i32_0 : i32, i32
  }
  func.func @transform_5(%arg0: i32) -> (i32, i32) {
    %c0_i32 = arith.constant 0 : i32
    %c0_i32_0 = arith.constant 0 : i32
    return %arg0, %c0_i32 : i32, i32
  }
}

</mosaic_0001>

<llo_original>
// kernel: tpu_custom_call.1
$region0: #{tpu_custom_call.1}
  #allocation0 [shape = 'u32[]', space=smem, size = 0x4, offset = 0x4, fixed_abs, tag = 'smem constant byte address 0x4 - core index']
  #allocation1 [shape = 'u32[72,128]{1,0:T(1,128)}', space=vmem, size = 0x9000, scoped, tag = 'internal scratch']
  %s0 = inlined_call_operand.vmem [shape: f32[2,1024], index: 0, kind: input, shape index: {}]
  %s1 = inlined_call_operand.vmem [shape: bf16[1024,32], index: 1, kind: input, shape index: {}]
  %s2 = inlined_call_operand.vmem [shape: f32[1,32], index: 2, kind: input, shape index: {}]
  %s3 = inlined_call_operand.vmem [shape: bf16[32,16], index: 3, kind: input, shape index: {}]
  %s4 = inlined_call_operand.vmem [shape: f32[1,16], index: 4, kind: input, shape index: {}]
  %s5 = inlined_call_operand.hbm [shape: f32[2,16], index: 5, kind: output, shape index: {}]
  %s6 = sld [smem:[#allocation0]]
  $region30: #{tpu_custom_call.1} parent=0
    _
  %s8 = ssub.s32 1, %s6
  %s9 = scalar_select 0, %s8, %s6
  $region1: #{tpu_custom_call.1} parent=0
    #allocation2 [shape = 'u8[1024]{0}', space=vmem, size = 0x400, scoped, tag = 'output window, operand 0, single buffered']
    #allocation3 [shape = 's32[1]{0}', space=sflag, size = 0x4, scoped, tag = 'scoped memory for tpu_custom_call.1']
    %10 = vsyncpa [#allocation3], 0
    // Predicated region
    $region2: #{tpu_custom_call.1} parent=1 // pred_check
      _
    $region3: #{tpu_custom_call.1} parent=1 // pred_check_branch
      %12 = sbr.rel (0) target = $region5
    $region4: #{tpu_custom_call.1} parent=1 // pred_region
      _
    $region5: #{tpu_custom_call.1} parent=1 // pred_fallthru
      _
    // Predicated region
    $region6: #{tpu_custom_call.1} parent=1 // pred_check
      _
    $region7: #{tpu_custom_call.1} parent=1 // pred_check_branch
      %14 = sbr.rel (0) target = $region9
    $region8: #{tpu_custom_call.1} parent=1 // pred_region
      _
    $region9: #{tpu_custom_call.1} parent=1 // pred_fallthru
      _
    // Predicated region
    $region10: #{tpu_custom_call.1} parent=1 // pred_check
      _
    $region11: #{tpu_custom_call.1} parent=1 // pred_check_branch
      %16 = sbr.rel (0) target = $region13
    $region12: #{tpu_custom_call.1} parent=1 // pred_region
      _
    $region13: #{tpu_custom_call.1} parent=1 // pred_fallthru
      _
    // Predicated region
    $region14: #{tpu_custom_call.1} parent=1 // pred_check
      _
    $region15: #{tpu_custom_call.1} parent=1 // pred_check_branch
      %18 = sbr.rel (0) target = $region17
    $region16: #{tpu_custom_call.1} parent=1 // pred_region
      _
    $region17: #{tpu_custom_call.1} parent=1 // pred_fallthru
      _
    // Predicated region
    $region18: #{tpu_custom_call.1} parent=1 // pred_check
      _
    $region19: #{tpu_custom_call.1} parent=1 // pred_check_branch
      %20 = sbr.rel (0) target = $region21
    $region20: #{tpu_custom_call.1} parent=1 // pred_region
      _
    $region21: #{tpu_custom_call.1} parent=1 // pred_fallthru
      _
    %v22 = vld [vmem:[%s0] sm:$0xff]
    %v23 = vld [vmem:[%s0 + $0x8] sm:$0xff]
    %26 = vst [vmem:[#allocation1] ss:$4 sm:$0xff] %v22
    %s27 = scalar_lea.vmem [#allocation1], 32
    %28 = vst [vmem:[%s27] ss:$4 sm:$0xff] %v23
    %v29 = vld.sshfl [vmem:[#allocation1] sm:$0xff pattern:$0x73625140]
    %v30 = vld.sshfl [vmem:[#allocation1 + $0x8] sm:$0xff pattern:$0x73625140]
    %v31 = vld.sshfl [vmem:[#allocation1 + $0x10] sm:$0xff pattern:$0x73625140]
    %v32 = vld.sshfl [vmem:[#allocation1 + $0x18] sm:$0xff pattern:$0x73625140]
    %v33 = vld.sshfl [vmem:[#allocation1 + $0x20] sm:$0xff pattern:$0x73625140]
    %v34 = vld.sshfl [vmem:[#allocation1 + $0x28] sm:$0xff pattern:$0x73625140]
    %v35 = vld.sshfl [vmem:[#allocation1 + $0x30] sm:$0xff pattern:$0x73625140]
    %v36 = vld.sshfl [vmem:[#allocation1 + $0x38] sm:$0xff pattern:$0x73625140]
    %v45 = vpack.c.bf16 %v29, %v29
    %v46 = vpack.c.bf16 %v30, %v30
    %v47 = vpack.c.bf16 %v31, %v31
    %v48 = vpack.c.bf16 %v32, %v32
    %v49 = vpack.c.bf16 %v33, %v33
    %v50 = vpack.c.bf16 %v34, %v34
    %v51 = vpack.c.bf16 %v35, %v35
    %v52 = vpack.c.bf16 %v36, %v36
    %v53 = vld [vmem:[%s1] sm:$0xf]
    %v54 = vld [vmem:[%s1 + $0x4] sm:$0xf]
    %v55 = vld [vmem:[%s1 + $0x8] sm:$0xf]
    %v56 = vld [vmem:[%s1 + $0xc] sm:$0xf]
    %v57 = vld [vmem:[%s1 + $0x10] sm:$0xf]
    %v58 = vld [vmem:[%s1 + $0x14] sm:$0xf]
    %v59 = vld [vmem:[%s1 + $0x18] sm:$0xf]
    %v60 = vld [vmem:[%s1 + $0x1c] sm:$0xf]
    %v61 = vld [vmem:[%s1 + $0x20] sm:$0xf]
    %v62 = vld [vmem:[%s1 + $0x24] sm:$0xf]
    %v63 = vld [vmem:[%s1 + $0x28] sm:$0xf]
    %v64 = vld [vmem:[%s1 + $0x2c] sm:$0xf]
    %v65 = vld [vmem:[%s1 + $0x30] sm:$0xf]
    %v66 = vld [vmem:[%s1 + $0x34] sm:$0xf]
    %v67 = vld [vmem:[%s1 + $0x38] sm:$0xf]
    %v68 = vld [vmem:[%s1 + $0x3c] sm:$0xf]
    %v69 = vld [vmem:[%s1 + $0x40] sm:$0xf]
    %v70 = vld [vmem:[%s1 + $0x44] sm:$0xf]
    %v71 = vld [vmem:[%s1 + $0x48] sm:$0xf]
    %v72 = vld [vmem:[%s1 + $0x4c] sm:$0xf]
    %v73 = vld [vmem:[%s1 + $0x50] sm:$0xf]
    %v74 = vld [vmem:[%s1 + $0x54] sm:$0xf]
    %v75 = vld [vmem:[%s1 + $0x58] sm:$0xf]
    %v76 = vld [vmem:[%s1 + $0x5c] sm:$0xf]
    %v77 = vld [vmem:[%s1 + $0x60] sm:$0xf]
    %v78 = vld [vmem:[%s1 + $0x64] sm:$0xf]
    %v79 = vld [vmem:[%s1 + $0x68] sm:$0xf]
    %v80 = vld [vmem:[%s1 + $0x6c] sm:$0xf]
    %v81 = vld [vmem:[%s1 + $0x70] sm:$0xf]
    %v82 = vld [vmem:[%s1 + $0x74] sm:$0xf]
    %v83 = vld [vmem:[%s1 + $0x78] sm:$0xf]
    %v84 = vld [vmem:[%s1 + $0x7c] sm:$0xf]
    %v85 = vld [vmem:[%s1 + $0x80] sm:$0xf]
    %v86 = vld [vmem:[%s1 + $0x84] sm:$0xf]
    %v87 = vld [vmem:[%s1 + $0x88] sm:$0xf]
    %v88 = vld [vmem:[%s1 + $0x8c] sm:$0xf]
    %v89 = vld [vmem:[%s1 + $0x90] sm:$0xf]
    %v90 = vld [vmem:[%s1 + $0x94] sm:$0xf]
    %v91 = vld [vmem:[%s1 + $0x98] sm:$0xf]
    %v92 = vld [vmem:[%s1 + $0x9c] sm:$0xf]
    %v93 = vld [vmem:[%s1 + $0xa0] sm:$0xf]
    %v94 = vld [vmem:[%s1 + $0xa4] sm:$0xf]
    %v95 = vld [vmem:[%s1 + $0xa8] sm:$0xf]
    %v96 = vld [vmem:[%s1 + $0xac] sm:$0xf]
    %v97 = vld [vmem:[%s1 + $0xb0] sm:$0xf]
    %v98 = vld [vmem:[%s1 + $0xb4] sm:$0xf]
    %v99 = vld [vmem:[%s1 + $0xb8] sm:$0xf]
    %v100 = vld [vmem:[%s1 + $0xbc] sm:$0xf]
    %v101 = vld [vmem:[%s1 + $0xc0] sm:$0xf]
    %v102 = vld [vmem:[%s1 + $0xc4] sm:$0xf]
    %v103 = vld [vmem:[%s1 + $0xc8] sm:$0xf]
    %v104 = vld [vmem:[%s1 + $0xcc] sm:$0xf]
    %v105 = vld [vmem:[%s1 + $0xd0] sm:$0xf]
    %v106 = vld [vmem:[%s1 + $0xd4] sm:$0xf]
    %v107 = vld [vmem:[%s1 + $0xd8] sm:$0xf]
    %v108 = vld [vmem:[%s1 + $0xdc] sm:$0xf]
    %v109 = vld [vmem:[%s1 + $0xe0] sm:$0xf]
    %v110 = vld [vmem:[%s1 + $0xe4] sm:$0xf]
    %v111 = vld [vmem:[%s1 + $0xe8] sm:$0xf]
    %v112 = vld [vmem:[%s1 + $0xec] sm:$0xf]
    %v113 = vld [vmem:[%s1 + $0xf0] sm:$0xf]
    %v114 = vld [vmem:[%s1 + $0xf4] sm:$0xf]
    %v115 = vld [vmem:[%s1 + $0xf8] sm:$0xf]
    %v116 = vld [vmem:[%s1 + $0xfc] sm:$0xf]
    %v117 = vld [vmem:[%s1 + $0x100] sm:$0xf]
    %v118 = vld [vmem:[%s1 + $0x104] sm:$0xf]
    %v119 = vld [vmem:[%s1 + $0x108] sm:$0xf]
    %v120 = vld [vmem:[%s1 + $0x10c] sm:$0xf]
    %v121 = vld [vmem:[%s1 + $0x110] sm:$0xf]
    %v122 = vld [vmem:[%s1 + $0x114] sm:$0xf]
    %v123 = vld [vmem:[%s1 + $0x118] sm:$0xf]
    %v124 = vld [vmem:[%s1 + $0x11c] sm:$0xf]
    %v125 = vld [vmem:[%s1 + $0x120] sm:$0xf]
    %v126 = vld [vmem:[%s1 + $0x124] sm:$0xf]
    %v127 = vld [vmem:[%s1 + $0x128] sm:$0xf]
    %v128 = vld [vmem:[%s1 + $0x12c] sm:$0xf]
    %v129 = vld [vmem:[%s1 + $0x130] sm:$0xf]
    %v130 = vld [vmem:[%s1 + $0x134] sm:$0xf]
    %v131 = vld [vmem:[%s1 + $0x138] sm:$0xf]
    %v132 = vld [vmem:[%s1 + $0x13c] sm:$0xf]
    %v133 = vld [vmem:[%s1 + $0x140] sm:$0xf]
    %v134 = vld [vmem:[%s1 + $0x144] sm:$0xf]
    %v135 = vld [vmem:[%s1 + $0x148] sm:$0xf]
    %v136 = vld [vmem:[%s1 + $0x14c] sm:$0xf]
    %v137 = vld [vmem:[%s1 + $0x150] sm:$0xf]
    %v138 = vld [vmem:[%s1 + $0x154] sm:$0xf]
    %v139 = vld [vmem:[%s1 + $0x158] sm:$0xf]
    %v140 = vld [vmem:[%s1 + $0x15c] sm:$0xf]
    %v141 = vld [vmem:[%s1 + $0x160] sm:$0xf]
    %v142 = vld [vmem:[%s1 + $0x164] sm:$0xf]
    %v143 = vld [vmem:[%s1 + $0x168] sm:$0xf]
    %v144 = vld [vmem:[%s1 + $0x16c] sm:$0xf]
    %v145 = vld [vmem:[%s1 + $0x170] sm:$0xf]
    %v146 = vld [vmem:[%s1 + $0x174] sm:$0xf]
    %v147 = vld [vmem:[%s1 + $0x178] sm:$0xf]
    %v148 = vld [vmem:[%s1 + $0x17c] sm:$0xf]
    %v149 = vld [vmem:[%s1 + $0x180] sm:$0xf]
    %v150 = vld [vmem:[%s1 + $0x184] sm:$0xf]
    %v151 = vld [vmem:[%s1 + $0x188] sm:$0xf]
    %v152 = vld [vmem:[%s1 + $0x18c] sm:$0xf]
    %v153 = vld [vmem:[%s1 + $0x190] sm:$0xf]
    %v154 = vld [vmem:[%s1 + $0x194] sm:$0xf]
    %v155 = vld [vmem:[%s1 + $0x198] sm:$0xf]
    %v156 = vld [vmem:[%s1 + $0x19c] sm:$0xf]
    %v157 = vld [vmem:[%s1 + $0x1a0] sm:$0xf]
    %v158 = vld [vmem:[%s1 + $0x1a4] sm:$0xf]
    %v159 = vld [vmem:[%s1 + $0x1a8] sm:$0xf]
    %v160 = vld [vmem:[%s1 + $0x1ac] sm:$0xf]
    %v161 = vld [vmem:[%s1 + $0x1b0] sm:$0xf]
    %v162 = vld [vmem:[%s1 + $0x1b4] sm:$0xf]
    %v163 = vld [vmem:[%s1 + $0x1b8] sm:$0xf]
    %v164 = vld [vmem:[%s1 + $0x1bc] sm:$0xf]
    %v165 = vld [vmem:[%s1 + $0x1c0] sm:$0xf]
    %v166 = vld [vmem:[%s1 + $0x1c4] sm:$0xf]
    %v167 = vld [vmem:[%s1 + $0x1c8] sm:$0xf]
    %v168 = vld [vmem:[%s1 + $0x1cc] sm:$0xf]
    %v169 = vld [vmem:[%s1 + $0x1d0] sm:$0xf]
    %v170 = vld [vmem:[%s1 + $0x1d4] sm:$0xf]
    %v171 = vld [vmem:[%s1 + $0x1d8] sm:$0xf]
    %v172 = vld [vmem:[%s1 + $0x1dc] sm:$0xf]
    %v173 = vld [vmem:[%s1 + $0x1e0] sm:$0xf]
    %v174 = vld [vmem:[%s1 + $0x1e4] sm:$0xf]
    %v175 = vld [vmem:[%s1 + $0x1e8] sm:$0xf]
    %v176 = vld [vmem:[%s1 + $0x1ec] sm:$0xf]
    %v177 = vld [vmem:[%s1 + $0x1f0] sm:$0xf]
    %v178 = vld [vmem:[%s1 + $0x1f4] sm:$0xf]
    %v179 = vld [vmem:[%s1 + $0x1f8] sm:$0xf]
    %v180 = vld [vmem:[%s1 + $0x1fc] sm:$0xf]
    %v181 = vld [vmem:[%s2] sm:$0x1]
    %v183 = vperm.slane %v181, 0
    %v313 = vunpack.c.l.b16 %v53
    %v314 = vunpack.c.l.b16 %v54
    %v315 = vunpack.c.l.b16 %v55
    %v316 = vunpack.c.l.b16 %v56
    %v317 = vunpack.c.l.b16 %v57
    %v318 = vunpack.c.l.b16 %v58
    %v319 = vunpack.c.l.b16 %v59
    %v320 = vunpack.c.l.b16 %v60
    %v321 = vunpack.c.l.b16 %v61
    %v322 = vunpack.c.l.b16 %v62
    %v323 = vunpack.c.l.b16 %v63
    %v324 = vunpack.c.l.b16 %v64
    %v325 = vunpack.c.l.b16 %v65
    %v326 = vunpack.c.l.b16 %v66
    %v327 = vunpack.c.l.b16 %v67
    %v328 = vunpack.c.l.b16 %v68
    %v329 = vunpack.c.l.b16 %v69
    %v330 = vunpack.c.l.b16 %v70
    %v331 = vunpack.c.l.b16 %v71
    %v332 = vunpack.c.l.b16 %v72
    %v333 = vunpack.c.l.b16 %v73
    %v334 = vunpack.c.l.b16 %v74
    %v335 = vunpack.c.l.b16 %v75
    %v336 = vunpack.c.l.b16 %v76
    %v337 = vunpack.c.l.b16 %v77
    %v338 = vunpack.c.l.b16 %v78
    %v339 = vunpack.c.l.b16 %v79
    %v340 = vunpack.c.l.b16 %v80
    %v341 = vunpack.c.l.b16 %v81
    %v342 = vunpack.c.l.b16 %v82
    %v343 = vunpack.c.l.b16 %v83
    %v344 = vunpack.c.l.b16 %v84
    %v345 = vunpack.c.l.b16 %v85
    %v346 = vunpack.c.l.b16 %v86
    %v347 = vunpack.c.l.b16 %v87
    %v348 = vunpack.c.l.b16 %v88
    %v349 = vunpack.c.l.b16 %v89
    %v350 = vunpack.c.l.b16 %v90
    %v351 = vunpack.c.l.b16 %v91
    %v352 = vunpack.c.l.b16 %v92
    %v353 = vunpack.c.l.b16 %v93
    %v354 = vunpack.c.l.b16 %v94
    %v355 = vunpack.c.l.b16 %v95
    %v356 = vunpack.c.l.b16 %v96
    %v357 = vunpack.c.l.b16 %v97
    %v358 = vunpack.c.l.b16 %v98
    %v359 = vunpack.c.l.b16 %v99
    %v360 = vunpack.c.l.b16 %v100
    %v361 = vunpack.c.l.b16 %v101
    %v362 = vunpack.c.l.b16 %v102
    %v363 = vunpack.c.l.b16 %v103
    %v364 = vunpack.c.l.b16 %v104
    %v365 = vunpack.c.l.b16 %v105
    %v366 = vunpack.c.l.b16 %v106
    %v367 = vunpack.c.l.b16 %v107
    %v368 = vunpack.c.l.b16 %v108
    %v369 = vunpack.c.l.b16 %v109
    %v370 = vunpack.c.l.b16 %v110
    %v371 = vunpack.c.l.b16 %v111
    %v372 = vunpack.c.l.b16 %v112
    %v373 = vunpack.c.l.b16 %v113
    %v374 = vunpack.c.l.b16 %v114
    %v375 = vunpack.c.l.b16 %v115
    %v376 = vunpack.c.l.b16 %v116
    %v377 = vunpack.c.l.b16 %v117
    %v378 = vunpack.c.l.b16 %v118
    %v379 = vunpack.c.l.b16 %v119
    %v380 = vunpack.c.l.b16 %v120
    %v381 = vunpack.c.l.b16 %v121
    %v382 = vunpack.c.l.b16 %v122
    %v383 = vunpack.c.l.b16 %v123
    %v384 = vunpack.c.l.b16 %v124
    %v385 = vunpack.c.l.b16 %v125
    %v386 = vunpack.c.l.b16 %v126
    %v387 = vunpack.c.l.b16 %v127
    %v388 = vunpack.c.l.b16 %v128
    %v389 = vunpack.c.l.b16 %v129
    %v390 = vunpack.c.l.b16 %v130
    %v391 = vunpack.c.l.b16 %v131
    %v392 = vunpack.c.l.b16 %v132
    %v393 = vunpack.c.l.b16 %v133
    %v394 = vunpack.c.l.b16 %v134
    %v395 = vunpack.c.l.b16 %v135
    %v396 = vunpack.c.l.b16 %v136
    %v397 = vunpack.c.l.b16 %v137
    %v398 = vunpack.c.l.b16 %v138
    %v399 = vunpack.c.l.b16 %v139
    %v400 = vunpack.c.l.b16 %v140
    %v401 = vunpack.c.l.b16 %v141
    %v402 = vunpack.c.l.b16 %v142
    %v403 = vunpack.c.l.b16 %v143
    %v404 = vunpack.c.l.b16 %v144
    %v405 = vunpack.c.l.b16 %v145
    %v406 = vunpack.c.l.b16 %v146
    %v407 = vunpack.c.l.b16 %v147
    %v408 = vunpack.c.l.b16 %v148
    %v409 = vunpack.c.l.b16 %v149
    %v410 = vunpack.c.l.b16 %v150
    %v411 = vunpack.c.l.b16 %v151
    %v412 = vunpack.c.l.b16 %v152
    %v413 = vunpack.c.l.b16 %v153
    %v414 = vunpack.c.l.b16 %v154
    %v415 = vunpack.c.l.b16 %v155
    %v416 = vunpack.c.l.b16 %v156
    %v417 = vunpack.c.l.b16 %v157
    %v418 = vunpack.c.l.b16 %v158
    %v419 = vunpack.c.l.b16 %v159
    %v420 = vunpack.c.l.b16 %v160
    %v421 = vunpack.c.l.b16 %v161
    %v422 = vunpack.c.l.b16 %v162
    %v423 = vunpack.c.l.b16 %v163
    %v424 = vunpack.c.l.b16 %v164
    %v425 = vunpack.c.l.b16 %v165
    %v426 = vunpack.c.l.b16 %v166
    %v427 = vunpack.c.l.b16 %v167
    %v428 = vunpack.c.l.b16 %v168
    %v429 = vunpack.c.l.b16 %v169
    %v430 = vunpack.c.l.b16 %v170
    %v431 = vunpack.c.l.b16 %v171
    %v432 = vunpack.c.l.b16 %v172
    %v433 = vunpack.c.l.b16 %v173
    %v434 = vunpack.c.l.b16 %v174
    %v435 = vunpack.c.l.b16 %v175
    %v436 = vunpack.c.l.b16 %v176
    %v437 = vunpack.c.l.b16 %v177
    %v438 = vunpack.c.l.b16 %v178
    %v439 = vunpack.c.l.b16 %v179
    %v440 = vunpack.c.l.b16 %v180
    %v441 = vpack.c.b16 %v314, %v313
    %v442 = vpack.c.b16 %v316, %v315
    %v443 = vpack.c.b16 %v318, %v317
    %v444 = vpack.c.b16 %v320, %v319
    %v445 = vpack.c.b16 %v322, %v321
    %v446 = vpack.c.b16 %v324, %v323
    %v447 = vpack.c.b16 %v326, %v325
    %v448 = vpack.c.b16 %v328, %v327
    %v449 = vpack.c.b16 %v330, %v329
    %v450 = vpack.c.b16 %v332, %v331
    %v451 = vpack.c.b16 %v334, %v333
    %v452 = vpack.c.b16 %v336, %v335
    %v453 = vpack.c.b16 %v338, %v337
    %v454 = vpack.c.b16 %v340, %v339
    %v455 = vpack.c.b16 %v342, %v341
    %v456 = vpack.c.b16 %v344, %v343
    %v457 = vpack.c.b16 %v346, %v345
    %v458 = vpack.c.b16 %v348, %v347
    %v459 = vpack.c.b16 %v350, %v349
    %v460 = vpack.c.b16 %v352, %v351
    %v461 = vpack.c.b16 %v354, %v353
    %v462 = vpack.c.b16 %v356, %v355
    %v463 = vpack.c.b16 %v358, %v357
    %v464 = vpack.c.b16 %v360, %v359
    %v465 = vpack.c.b16 %v362, %v361
    %v466 = vpack.c.b16 %v364, %v363
    %v467 = vpack.c.b16 %v366, %v365
    %v468 = vpack.c.b16 %v368, %v367
    %v469 = vpack.c.b16 %v370, %v369
    %v470 = vpack.c.b16 %v372, %v371
    %v471 = vpack.c.b16 %v374, %v373
    %v472 = vpack.c.b16 %v376, %v375
    %v473 = vpack.c.b16 %v378, %v377
    %v474 = vpack.c.b16 %v380, %v379
    %v475 = vpack.c.b16 %v382, %v381
    %v476 = vpack.c.b16 %v384, %v383
    %v477 = vpack.c.b16 %v386, %v385
    %v478 = vpack.c.b16 %v388, %v387
    %v479 = vpack.c.b16 %v390, %v389
    %v480 = vpack.c.b16 %v392, %v391
    %v481 = vpack.c.b16 %v394, %v393
    %v482 = vpack.c.b16 %v396, %v395
    %v483 = vpack.c.b16 %v398, %v397
    %v484 = vpack.c.b16 %v400, %v399
    %v485 = vpack.c.b16 %v402, %v401
    %v486 = vpack.c.b16 %v404, %v403
    %v487 = vpack.c.b16 %v406, %v405
    %v488 = vpack.c.b16 %v408, %v407
    %v489 = vpack.c.b16 %v410, %v409
    %v490 = vpack.c.b16 %v412, %v411
    %v491 = vpack.c.b16 %v414, %v413
    %v492 = vpack.c.b16 %v416, %v415
    %v493 = vpack.c.b16 %v418, %v417
    %v494 = vpack.c.b16 %v420, %v419
    %v495 = vpack.c.b16 %v422, %v421
    %v496 = vpack.c.b16 %v424, %v423
    %v497 = vpack.c.b16 %v426, %v425
    %v498 = vpack.c.b16 %v428, %v427
    %v499 = vpack.c.b16 %v430, %v429
    %v500 = vpack.c.b16 %v432, %v431
    %v501 = vpack.c.b16 %v434, %v433
    %v502 = vpack.c.b16 %v436, %v435
    %v503 = vpack.c.b16 %v438, %v437
    %v504 = vpack.c.b16 %v440, %v439
    %569 = vmatpush.bf16.msra.mxu0 %v448
    %570 = vmatpush.bf16.msra.mxu0 %v447
    %571 = vmatpush.bf16.msra.mxu0 %v446
    %572 = vmatpush.bf16.msra.mxu0 %v445
    %573 = vmatpush.bf16.msra.mxu0 %v444
    %574 = vmatpush.bf16.msra.mxu0 %v443
    %575 = vmatpush.bf16.msra.mxu0 %v442
    %576 = vmatpush.bf16.msra.mxu0 %v441
    %577 = vmatmul.bf16.gmra.mxu0 %v45
    %v578 = vpop.f32.mrf.mxu0
    %v579 = vadd.f32 %v183, %v578
    %v580 = vpop.f32.mrf.mxu0
    %581 = vdwg.mxu0
    %582 = vmatpush.bf16.msra.mxu0 %v456
    %583 = vmatpush.bf16.msra.mxu0 %v455
    %584 = vmatpush.bf16.msra.mxu0 %v454
    %585 = vmatpush.bf16.msra.mxu0 %v453
    %586 = vmatpush.bf16.msra.mxu0 %v452
    %587 = vmatpush.bf16.msra.mxu0 %v451
    %588 = vmatpush.bf16.msra.mxu0 %v450
    %589 = vmatpush.bf16.msra.mxu0 %v449
    %590 = vmatmul.bf16.gmra.mxu0 %v46
    %v591 = vpop.f32.mrf.mxu0
    %v592 = vadd.f32 %v579, %v591
    %v593 = vpop.f32.mrf.mxu0
    %594 = vdwg.mxu0
    %595 = vmatpush.bf16.msra.mxu0 %v464
    %596 = vmatpush.bf16.msra.mxu0 %v463
    %597 = vmatpush.bf16.msra.mxu0 %v462
    %598 = vmatpush.bf16.msra.mxu0 %v461
    %599 = vmatpush.bf16.msra.mxu0 %v460
    %600 = vmatpush.bf16.msra.mxu0 %v459
    %601 = vmatpush.bf16.msra.mxu0 %v458
    %602 = vmatpush.bf16.msra.mxu0 %v457
    %603 = vmatmul.bf16.gmra.mxu0 %v47
    %v604 = vpop.f32.mrf.mxu0
    %v605 = vadd.f32 %v592, %v604
    %v606 = vpop.f32.mrf.mxu0
    %607 = vdwg.mxu0
    %608 = vmatpush.bf16.msra.mxu0 %v472
    %609 = vmatpush.bf16.msra.mxu0 %v471
    %610 = vmatpush.bf16.msra.mxu0 %v470
    %611 = vmatpush.bf16.msra.mxu0 %v469
    %612 = vmatpush.bf16.msra.mxu0 %v468
    %613 = vmatpush.bf16.msra.mxu0 %v467
    %614 = vmatpush.bf16.msra.mxu0 %v466
    %615 = vmatpush.bf16.msra.mxu0 %v465
    %616 = vmatmul.bf16.gmra.mxu0 %v48
    %v617 = vpop.f32.mrf.mxu0
    %v618 = vadd.f32 %v605, %v617
    %v619 = vpop.f32.mrf.mxu0
    %620 = vdwg.mxu0
    %621 = vmatpush.bf16.msra.mxu0 %v480
    %622 = vmatpush.bf16.msra.mxu0 %v479
    %623 = vmatpush.bf16.msra.mxu0 %v478
    %624 = vmatpush.bf16.msra.mxu0 %v477
    %625 = vmatpush.bf16.msra.mxu0 %v476
    %626 = vmatpush.bf16.msra.mxu0 %v475
    %627 = vmatpush.bf16.msra.mxu0 %v474
    %628 = vmatpush.bf16.msra.mxu0 %v473
    %629 = vmatmul.bf16.gmra.mxu0 %v49
    %v630 = vpop.f32.mrf.mxu0
    %v631 = vadd.f32 %v618, %v630
    %v632 = vpop.f32.mrf.mxu0
    %633 = vdwg.mxu0
    %634 = vmatpush.bf16.msra.mxu0 %v488
    %635 = vmatpush.bf16.msra.mxu0 %v487
    %636 = vmatpush.bf16.msra.mxu0 %v486
    %637 = vmatpush.bf16.msra.mxu0 %v485
    %638 = vmatpush.bf16.msra.mxu0 %v484
    %639 = vmatpush.bf16.msra.mxu0 %v483
    %640 = vmatpush.bf16.msra.mxu0 %v482
    %641 = vmatpush.bf16.msra.mxu0 %v481
    %642 = vmatmul.bf16.gmra.mxu0 %v50
    %v643 = vpop.f32.mrf.mxu0
    %v644 = vadd.f32 %v631, %v643
    %v645 = vpop.f32.mrf.mxu0
    %646 = vdwg.mxu0
    %647 = vmatpush.bf16.msra.mxu0 %v496
    %648 = vmatpush.bf16.msra.mxu0 %v495
    %649 = vmatpush.bf16.msra.mxu0 %v494
    %650 = vmatpush.bf16.msra.mxu0 %v493
    %651 = vmatpush.bf16.msra.mxu0 %v492
    %652 = vmatpush.bf16.msra.mxu0 %v491
    %653 = vmatpush.bf16.msra.mxu0 %v490
    %654 = vmatpush.bf16.msra.mxu0 %v489
    %655 = vmatmul.bf16.gmra.mxu0 %v51
    %v656 = vpop.f32.mrf.mxu0
    %v657 = vadd.f32 %v644, %v656
    %v658 = vpop.f32.mrf.mxu0
    %659 = vdwg.mxu0
    %660 = vmatpush.bf16.msra.mxu0 %v504
    %661 = vmatpush.bf16.msra.mxu0 %v503
    %662 = vmatpush.bf16.msra.mxu0 %v502
    %663 = vmatpush.bf16.msra.mxu0 %v501
    %664 = vmatpush.bf16.msra.mxu0 %v500
    %665 = vmatpush.bf16.msra.mxu0 %v499
    %666 = vmatpush.bf16.msra.mxu0 %v498
    %667 = vmatpush.bf16.msra.mxu0 %v497
    %668 = vmatmul.bf16.gmra.mxu0 %v52
    %v669 = vpop.f32.mrf.mxu0
    %v670 = vadd.f32 %v657, %v669
    %v671 = vpop.f32.mrf.mxu0
    %672 = vdwg.mxu0
    %v673 = vmax.f32 %v670, 0.0
    %v674 = vpack.c.bf16 %v673, %v673
    %v675 = vld [vmem:[%s3] sm:$0xf]
    %v676 = vld [vmem:[%s3 + $0x4] sm:$0xf]
    %v677 = vld [vmem:[%s3 + $0x8] sm:$0xf]
    %v678 = vld [vmem:[%s3 + $0xc] sm:$0xf]
    %v679 = vld [vmem:[%s4] sm:$0x1]
    %v681 = vperm.slane %v679, 0
    %v687 = vunpack.c.l.b16 %v675
    %v688 = vunpack.c.l.b16 %v676
    %v689 = vunpack.c.l.b16 %v677
    %v690 = vunpack.c.l.b16 %v678
    %v691 = vpack.c.b16 %v688, %v687
    %v692 = vpack.c.b16 %v690, %v689
    %vm695 = vcmask 261120
    %v697 = vsel %vm695, %v674, 0
    %699 = vmatpush.bf16.msra.mxu0 0
    %700 = vmatpush.bf16.msra.mxu0 0
    %701 = vmatpush.bf16.msra.mxu0 0
    %702 = vmatpush.bf16.msra.mxu0 0
    %703 = vmatpush.bf16.msra.mxu0 0
    %704 = vmatpush.bf16.msra.mxu0 0
    %705 = vmatpush.bf16.msra.mxu0 %v692
    %706 = vmatpush.bf16.msra.mxu0 %v691
    %707 = vmatmul.bf16.gmra.mxu0 %v697
    %v708 = vpop.f32.mrf.mxu0
    %v709 = vadd.f32 %v681, %v708
    %v710 = vpop.f32.mrf.mxu0
    %711 = vdwg.mxu0
    %vm712 = vcmask 123904
    %713 = vst.msk [vmem:[#allocation2] sm:$0x3] %vm712, %v709
    // Predicated region
    $region22: #{tpu_custom_call.1} parent=1 // pred_check
      _
    $region23: #{tpu_custom_call.1} parent=1 // pred_check_branch
      %715 = sbr.rel (0) target = $region25
    $region24: #{tpu_custom_call.1} parent=1 // pred_region
      %717 = vsyncadd [#allocation3], 0
      %s719 = sshll.u32 [#allocation2], 4
      %s720 = int_to_ptr.vmem [resolvable:$true] %s719
      %s721 = sshll.u32 %s5, 4
      %s722 = int_to_ptr.hbm [resolvable:$true] %s721
      %724 = dma.vmem_to_hbm [thread:$0]  %s720, 32, %s722, [#allocation3]
    $region25: #{tpu_custom_call.1} parent=1 // pred_fallthru
      _
    // Predicated region
    $region26: #{tpu_custom_call.1} parent=1 // pred_check
      _
    $region27: #{tpu_custom_call.1} parent=1 // pred_check_branch
      %726 = sbr.rel (0) target = $region29
    $region28: #{tpu_custom_call.1} parent=1 // pred_region
      %728 = dma.done [#allocation3], 32
    $region29: #{tpu_custom_call.1} parent=1 // pred_fallthru
      _
    %729 = vsyncpa [#allocation3], 1

</llo_original>
